<compile_context>
chip_gen: v5e
topology: v5e:2x2
jax: 0.10.0
libtpu: 0.0.40
codegen_flags: <defaults>
</compile_context>

<pallas_src>
import jax
import jax.numpy as jnp
from jax import lax
from jax.experimental import pallas as pl
from jax.experimental.pallas import tpu as pltpu


def _pick_tile_rows(n_rows, hw, itemsize, target_bytes):
    """Row-tile size: multiple of 8 (or the full extent for tiny N), block fits
    target_bytes; prefer exact divisors, >=4 tiles (pipeline depth) and an even
    tile count (so the 2-way core split engages)."""
    if n_rows <= 8:
        return n_rows
    max_tile = (n_rows // 8) * 8
    cands = [t for t in range(8, max_tile + 1, 8)
             if t * hw * itemsize <= target_bytes]
    if not cands:
        return 8

    def n_tiles(t):
        return -(-n_rows // t)

    def divides(t):
        return n_rows % t == 0

    prefs = (
        lambda t: divides(t) and n_tiles(t) >= 4 and n_tiles(t) % 2 == 0,
        lambda t: divides(t) and n_tiles(t) >= 4,
        lambda t: n_tiles(t) >= 4 and n_tiles(t) % 2 == 0,
        lambda t: n_tiles(t) >= 4,
        lambda t: divides(t),
        lambda t: True,
    )
    for pred in prefs:
        sub = [t for t in cands if pred(t)]
        if sub:
            return max(sub)
    return max(cands)


def _leading_dim_semantics(splits):
    """CORE_PARALLEL only on chips with 2 TensorCores (v7x) and an even split;
    plain parallel otherwise (harmless on 1-TC v5e/v6e)."""
    if splits != 2:
        return pltpu.PARALLEL
    try:
        kind = jax.devices()[0].device_kind.lower()
    except Exception:
        kind = ""
    if "v7" in kind or "7x" in kind:
        return pltpu.CORE_PARALLEL
    return pltpu.PARALLEL


def _make_kernel(*, n_rows, tile_rows, inner_steps, hw, lane_width,
                 full_chunks, rem, use_weight, has_row_tail):
    n_acc = max(1, min(4, full_chunks))   # partial accumulators -> VALU ILP

    def kernel(*refs):
        it = iter(refs)
        pred_ref = next(it)
        gt_ref = next(it)
        w_ref = next(it) if use_weight else None
        out_ref = next(it)
        acc_ref = next(it)
        tail_ref = next(it) if rem else None

        i = pl.program_id(1)

        @pl.when(i == 0)
        def _init():
            acc_ref[...] = jnp.zeros_like(acc_ref)
            if rem:
                tail_ref[...] = jnp.zeros_like(tail_ref)

        # ---- chunk-wise lane fold straight from the refs -------------------
        # Never materialize the full (tile_rows, HW) squared diff; each chunk
        # is loaded, squared and folded immediately (bounded live set).
        accs = [None] * n_acc
        for c in range(full_chunks):
            lo, hi = c * lane_width, (c + 1) * lane_width
            d = (pred_ref[:, lo:hi].astype(jnp.float32)
                 - gt_ref[:, lo:hi].astype(jnp.float32))
            sq = d * d
            k = c % n_acc
            accs[k] = sq if accs[k] is None else accs[k] + sq
        folded = accs[0]
        for k in range(1, n_acc):
            folded = folded + accs[k]

        if rem:  # HW % 128 != 0: narrow tail chunk goes to its own scratch
            lo = full_chunks * lane_width
            dt = (pred_ref[:, lo:hw].astype(jnp.float32)
                  - gt_ref[:, lo:hw].astype(jnp.float32))
            sq_tail = dt * dt
        else:
            sq_tail = None

        if use_weight:
            w = w_ref[...].astype(jnp.float32)            # (tile_rows, 1)
            w2 = w * w
            folded = folded * w2
            if rem:
                sq_tail = sq_tail * w2

        if has_row_tail:
            tile_idx = pl.program_id(0) * inner_steps + i
            rows_valid = n_rows - tile_idx * tile_rows
            rid = lax.broadcasted_iota(jnp.int32, folded.shape, 0)
            folded = jnp.where(rid < rows_valid, folded, 0.0)
            if rem:
                rid_t = lax.broadcasted_iota(jnp.int32, sq_tail.shape, 0)
                sq_tail = jnp.where(rid_t < rows_valid, sq_tail, 0.0)

        acc_ref[...] += folded
        if rem:
            tail_ref[...] += sq_tail

        @pl.when(i == pl.num_programs(1) - 1)
        def _finalize():
            total = jnp.sum(acc_ref[...])
            if rem:
                total = total + jnp.sum(tail_ref[...])
            out_ref[0, 0] = total          # one XLU tree-reduce per split

    return kernel


def joints_mse_loss(output, target, target_weight=None, use_target_weight=True,
                    *, tile_rows=None, target_block_bytes=4 * 1024 * 1024):
    """output/target: (B, J, H, W); target_weight: (B, J, 1). Returns f32 scalar."""
    B, J, H, W = output.shape
    HW = H * W
    N = B * J

    # Keep the wire dtype (bf16 inputs stay bf16 -> half the HBM traffic).
    pred = output.reshape(N, HW)
    gt = target.reshape(N, HW)

    itemsize = max(jnp.dtype(output.dtype).itemsize,
                   jnp.dtype(target.dtype).itemsize)
    if tile_rows is None:
        tile_rows = _pick_tile_rows(N, HW, itemsize, target_block_bytes)
    if tile_rows != N:
        assert tile_rows % 8 == 0 and 0 < tile_rows <= N, (
            "tile_rows must be a multiple of 8 and <= B*J (or equal B*J)")

    num_row_tiles = -(-N // tile_rows)                    # cdiv
    splits = 2 if (num_row_tiles >= 2 and num_row_tiles % 2 == 0) else 1
    inner_steps = num_row_tiles // splits
    has_row_tail = (num_row_tiles * tile_rows != N)

    if HW >= 128:
        lane_width = 128
        full_chunks = HW // 128
        rem = HW % 128
    else:
        lane_width = HW
        full_chunks = 1
        rem = 0

    hm_index = lambda c, i: (c * inner_steps + i, 0)
    in_specs = [pl.BlockSpec((tile_rows, HW), hm_index),
                pl.BlockSpec((tile_rows, HW), hm_index)]
    inputs = [pred, gt]
    if use_target_weight:
        w = target_weight.reshape(N, 1)
        in_specs.append(pl.BlockSpec((tile_rows, 1), hm_index))
        inputs.append(w)

    scratch_shapes = [pltpu.VMEM((tile_rows, lane_width), jnp.float32)]
    if rem:
        scratch_shapes.append(pltpu.VMEM((tile_rows, rem), jnp.float32))

    kernel = _make_kernel(n_rows=N, tile_rows=tile_rows, inner_steps=inner_steps,
                          hw=HW, lane_width=lane_width, full_chunks=full_chunks,
                          rem=rem, use_weight=use_target_weight,
                          has_row_tail=has_row_tail)

    # Scoped-VMEM budget: 2 streams x 2 pipeline buffers x block + weight +
    # scratch, with headroom.  Raised above v5e's 16 MiB default, kept well
    # under v7x's 64 MiB physical per-TC VMEM.
    block_bytes = tile_rows * HW * itemsize
    resident = 4 * block_bytes + tile_rows * (lane_width + rem) * 4
    if use_target_weight:
        resident += 2 * tile_rows * jnp.dtype(target_weight.dtype).itemsize
    vmem_limit = min(max(int(1.5 * resident) + (8 << 20), 32 << 20), 48 << 20)

    partials = pl.pallas_call(
        kernel,
        out_shape=jax.ShapeDtypeStruct((splits, 1), jnp.float32),
        grid_spec=pltpu.PrefetchScalarGridSpec(
            num_scalar_prefetch=0,
            grid=(splits, inner_steps),
            in_specs=in_specs,
            out_specs=pl.BlockSpec((1, 1), lambda c, i: (c, 0),
                                   memory_space=pltpu.SMEM),
            scratch_shapes=scratch_shapes,
        ),
        compiler_params=pltpu.CompilerParams(
            dimension_semantics=(_leading_dim_semantics(splits),
                                 pltpu.ARBITRARY),
            vmem_limit_bytes=vmem_limit),
    )(*inputs)

    scale = jnp.float32(0.5 / (B * J * HW))
    return jnp.sum(partials) * scale


def _reference(output, target, target_weight, use_target_weight=True):
    B, J, H, W = output.shape
    pred = output.reshape(B, J, -1).astype(jnp.float32)
    gt = target.reshape(B, J, -1).astype(jnp.float32)
    loss = jnp.float32(0.0)
    for j in range(J):
        p = pred[:, j, :]
        g = gt[:, j, :]
        if use_target_weight:
            wj = target_weight[:, j].astype(jnp.float32)  # (B, 1)
            p = p * wj
            g = g * wj
        loss = loss + 0.5 * jnp.mean((p - g) ** 2)
    return loss / J


def _check(out, tgt, wgt, use_w):
    got = jax.block_until_ready(
        joints_mse_loss(out, tgt, wgt, use_target_weight=use_w))
    ref = _reference(out, tgt, wgt, use_target_weight=use_w)
    assert jnp.allclose(got, ref, rtol=1e-5, atol=1e-6), (got, ref)


if __name__ == "__main__":
    key = jax.random.PRNGKey(0)

    # --- Small canonical shape -------------------------------------------
    B, J, H, W = 2, 4, 16, 16
    k1, k2, k3 = jax.random.split(key, 3)
    output = jax.random.normal(k1, (B, J, H, W), dtype=jnp.float32)
    target = jax.random.normal(k2, (B, J, H, W), dtype=jnp.float32)
    target_weight = jax.random.uniform(k3, (B, J, 1), dtype=jnp.float32)
    _check(output, target, target_weight, True)
    _check(output, target, target_weight, False)

    # --- Larger shape: multi-tile grid + 2-way split -----------------------
    B2, J2, H2, W2 = 4, 16, 16, 16
    k4, k5, k6 = jax.random.split(jax.random.PRNGKey(0), 3)
    out2 = jax.random.normal(k4, (B2, J2, H2, W2), dtype=jnp.float32)
    tgt2 = jax.random.normal(k5, (B2, J2, H2, W2), dtype=jnp.float32)
    wgt2 = jax.random.uniform(k6, (B2, J2, 1), dtype=jnp.float32)
    _check(out2, tgt2, wgt2, True)

    # --- Awkward shape: ragged B*J (masked row tail) + HW % 128 != 0 -------
    B3, J3, H3, W3 = 2, 5, 12, 12
    k7, k8, k9 = jax.random.split(jax.random.PRNGKey(1), 3)
    out3 = jax.random.normal(k7, (B3, J3, H3, W3), dtype=jnp.float32)
    tgt3 = jax.random.normal(k8, (B3, J3, H3, W3), dtype=jnp.float32)
    wgt3 = jax.random.uniform(k9, (B3, J3, 1), dtype=jnp.float32)
    _check(out3, tgt3, wgt3, True)
    _check(out3, tgt3, wgt3, False)

    print("KERNEL_OK")
</pallas_src>

<mosaic_0001>
module attributes {stable_mosaic.version = 11 : i64} {
  func.func @kernel(%arg0: i32, %arg1: i32, %arg2: memref<8x256xf32, #tpu.memory_space<vmem>>, %arg3: memref<8x256xf32, #tpu.memory_space<vmem>>, %arg4: memref<8x1xf32, #tpu.memory_space<vmem>>, %arg5: memref<1x1xf32, #tpu.memory_space<smem>>, %arg6: memref<8x128xf32, #tpu.memory_space<vmem>>) attributes {dimension_semantics = [#tpu.dimension_semantics<parallel>, #tpu.dimension_semantics<arbitrary>], iteration_bounds = array<i64: 1, 1>, scalar_prefetch = 0 : i64, scratch_operands = 1 : i64, tpu.core_type = #tpu.core_type<tc>, window_params = [{transform_indices = @transform_0, window_bounds = array<i64: 8, 256>}, {transform_indices = @transform_1, window_bounds = array<i64: 8, 256>}, {transform_indices = @transform_2, window_bounds = array<i64: 8, 1>}, {transform_indices = @transform_3, window_bounds = array<i64: 1, 1>}]} {
    %c0_i32 = arith.constant 0 : i32
    %0 = arith.cmpi eq, %arg1, %c0_i32 : i32
    %1 = arith.extui %0 : i1 to i32
    %c0_i32_0 = arith.constant 0 : i32
    %2 = arith.cmpi ne, %1, %c0_i32_0 : i32
    scf.if %2 {
      %cst = arith.constant 0.000000e+00 : f32
      %22 = vector.broadcast %cst : f32 to vector<8x128xf32>
      %c0_15 = arith.constant 0 : index
      %c0_16 = arith.constant 0 : index
      %23 = vector.load %arg6[%c0_15, %c0_16] : memref<8x128xf32, #tpu.memory_space<vmem>>, vector<8x128xf32>
      tpu.vector_store %arg6[%c0_15, %c0_16], %22 {strides = array<i32>} : memref<8x128xf32, #tpu.memory_space<vmem>>, vector<8x128xf32>,
    } else {
    }
    %c0 = arith.constant 0 : index
    %c0_1 = arith.constant 0 : index
    %3 = vector.load %arg2[%c0, %c0_1] : memref<8x256xf32, #tpu.memory_space<vmem>>, vector<8x128xf32>
    %c0_2 = arith.constant 0 : index
    %c0_3 = arith.constant 0 : index
    %4 = vector.load %arg3[%c0_2, %c0_3] : memref<8x256xf32, #tpu.memory_space<vmem>>, vector<8x128xf32>
    %5 = arith.subf %3, %4 : vector<8x128xf32>
    %6 = arith.mulf %5, %5 : vector<8x128xf32>
    %c0_4 = arith.constant 0 : index
    %c128 = arith.constant 128 : index
    %7 = vector.load %arg2[%c0_4, %c128] : memref<8x256xf32, #tpu.memory_space<vmem>>, vector<8x128xf32>
    %c0_5 = arith.constant 0 : index
    %c128_6 = arith.constant 128 : index
    %8 = vector.load %arg3[%c0_5, %c128_6] : memref<8x256xf32, #tpu.memory_space<vmem>>, vector<8x128xf32>
    %9 = arith.subf %7, %8 : vector<8x128xf32>
    %10 = arith.mulf %9, %9 : vector<8x128xf32>
    %11 = arith.addf %6, %10 : vector<8x128xf32>
    %c0_7 = arith.constant 0 : index
    %c0_8 = arith.constant 0 : index
    %12 = vector.load %arg4[%c0_7, %c0_8] : memref<8x1xf32, #tpu.memory_space<vmem>>, vector<8x1xf32>
    %13 = arith.mulf %12, %12 : vector<8x1xf32>
    %14 = vector.broadcast %13 : vector<8x1xf32> to vector<8x128xf32>
    %15 = arith.mulf %11, %14 : vector<8x128xf32>
    %c0_9 = arith.constant 0 : index
    %c0_10 = arith.constant 0 : index
    %16 = vector.load %arg6[%c0_9, %c0_10] : memref<8x128xf32, #tpu.memory_space<vmem>>, vector<8x128xf32>
    %17 = arith.addf %16, %15 : vector<8x128xf32>
    %c0_11 = arith.constant 0 : index
    %c0_12 = arith.constant 0 : index
    %18 = vector.load %arg6[%c0_11, %c0_12] : memref<8x128xf32, #tpu.memory_space<vmem>>, vector<8x128xf32>
    tpu.vector_store %arg6[%c0_11, %c0_12], %17 {strides = array<i32>} : memref<8x128xf32, #tpu.memory_space<vmem>>, vector<8x128xf32>,
    %c0_i32_13 = arith.constant 0 : i32
    %19 = arith.cmpi eq, %arg1, %c0_i32_13 : i32
    %20 = arith.extui %19 : i1 to i32
    %c0_i32_14 = arith.constant 0 : i32
    %21 = arith.cmpi ne, %20, %c0_i32_14 : i32
    scf.if %21 {
      %c0_15 = arith.constant 0 : index
      %c0_16 = arith.constant 0 : index
      %22 = vector.load %arg6[%c0_15, %c0_16] : memref<8x128xf32, #tpu.memory_space<vmem>>, vector<8x128xf32>
      %23 = vector.shape_cast %22 : vector<8x128xf32> to vector<1x8x128xf32>
      %cst = arith.constant dense<0.000000e+00> : vector<1xf32>
      %24 = vector.multi_reduction <add>, %23, %cst [1, 2] : vector<1x8x128xf32> to vector<1xf32>
      %25 = vector.shape_cast %24 : vector<1xf32> to vector<1x1x1xf32>
      %26 = vector.extract %25[0, 0, 0] : f32 from vector<1x1x1xf32>
      %c0_17 = arith.constant 0 : index
      %c0_18 = arith.constant 0 : index
      %27 = memref.load %arg5[%c0_17, %c0_18] : memref<1x1xf32, #tpu.memory_space<smem>>
      memref.store %26, %arg5[%c0_17, %c0_18] : memref<1x1xf32, #tpu.memory_space<smem>>
    } else {
    }
    return
  }
  func.func @transform_0(%arg0: i32, %arg1: i32) -> (i32, i32) {
    %c1_i32 = arith.constant 1 : i32
    %0 = arith.muli %arg0, %c1_i32 : i32
    %1 = arith.addi %0, %arg1 : i32
    %c0_i32 = arith.constant 0 : i32
    %c0_i32_0 = arith.constant 0 : i32
    return %1, %c0_i32 : i32, i32
  }
  func.func @transform_1(%arg0: i32, %arg1: i32) -> (i32, i32) {
    %c1_i32 = arith.constant 1 : i32
    %0 = arith.muli %arg0, %c1_i32 : i32
    %1 = arith.addi %0, %arg1 : i32
    %c0_i32 = arith.constant 0 : i32
    %c0_i32_0 = arith.constant 0 : i32
    return %1, %c0_i32 : i32, i32
  }
  func.func @transform_2(%arg0: i32, %arg1: i32) -> (i32, i32) {
    %c1_i32 = arith.constant 1 : i32
    %0 = arith.muli %arg0, %c1_i32 : i32
    %1 = arith.addi %0, %arg1 : i32
    %c0_i32 = arith.constant 0 : i32
    %c0_i32_0 = arith.constant 0 : i32
    return %1, %c0_i32 : i32, i32
  }
  func.func @transform_3(%arg0: i32, %arg1: i32) -> (i32, i32) {
    %c0_i32 = arith.constant 0 : i32
    %c0_i32_0 = arith.constant 0 : i32
    return %arg0, %c0_i32 : i32, i32
  }
}

</mosaic_0001>

<llo_original>
// kernel: tpu_custom_call.1
$region0: #{tpu_custom_call.1}
  #allocation0 [shape = 'u32[]', space=smem, size = 0x4, offset = 0x4, fixed_abs, tag = 'smem constant byte address 0x4 - core index']
  #allocation1 [shape = 'u32[72,128]{1,0:T(1,128)}', space=vmem, size = 0x9000, scoped, tag = 'internal scratch']
  #allocation2 [shape = 'f32[8,128]{1,0:T(8,128)}', space=vmem, size = 0x1000, scoped, tag = 'scratch operand']
  %s0 = inlined_call_operand.hbm [shape: f32[8,256], index: 0, kind: input, shape index: {}]
  %s1 = inlined_call_operand.hbm [shape: f32[8,256], index: 1, kind: input, shape index: {}]
  %s2 = inlined_call_operand.vmem [shape: f32[8,1], index: 2, kind: input, shape index: {}]
  %s3 = inlined_call_operand.hbm [shape: f32[1,1], index: 3, kind: output, shape index: {}]
  %s4 = sld [smem:[#allocation0]]
  $region38: #{tpu_custom_call.1} parent=0
    _
  %s6 = ssub.s32 1, %s4
  %s7 = scalar_select 0, %s6, %s4
  $region1: #{tpu_custom_call.1} parent=0
    #allocation3 [shape = 'u8[8192]{0}', space=vmem, size = 0x2000, scoped, tag = 'input window, operand 0, single buffered']
    #allocation4 [shape = 's32[1]{0}', space=sflag, size = 0x4, scoped, tag = 'scoped memory for tpu_custom_call.1']
    #allocation5 [shape = 's32[1]{0}', space=sflag, size = 0x4, scoped, tag = 'scoped memory for tpu_custom_call.1']
    #allocation6 [shape = 'u8[8192]{0}', space=vmem, size = 0x2000, scoped, tag = 'input window, operand 1, single buffered']
    #allocation7 [shape = 's32[1]{0}', space=sflag, size = 0x4, scoped, tag = 'scoped memory for tpu_custom_call.1']
    #allocation8 [shape = 'u8[512]{0}', space=smem, size = 0x200, scoped, tag = 'output window, operand 0, single buffered']
    %8 = vsyncpa [#allocation4], 0
    %9 = vsyncpa [#allocation7], 0
    %10 = vsyncpa [#allocation5], 0
    // Predicated region
    $region2: #{tpu_custom_call.1} parent=1 // pred_check
      _
    $region3: #{tpu_custom_call.1} parent=1 // pred_check_branch
      %12 = sbr.rel (0) target = $region5
    $region4: #{tpu_custom_call.1} parent=1 // pred_region
      %s13 = sadd.s32 0, 0
      %15 = vsyncadd [#allocation4], 0
      %s16 = smul.addr %s13, 2
      %s17 = smul.addr %s16, 8
      %s18 = scalar_lea.hbm %s0, %s17
      %s20 = sshll.u32 %s18, 4
      %s21 = int_to_ptr.hbm [resolvable:$true] %s20
      %s22 = sshll.u32 [#allocation3], 4
      %s23 = int_to_ptr.vmem [resolvable:$true] %s22
      %25 = dma.hbm_to_vmem [thread:$0]  %s21, 256, %s23, [#allocation4]
    $region5: #{tpu_custom_call.1} parent=1 // pred_fallthru
      _
    // Predicated region
    $region6: #{tpu_custom_call.1} parent=1 // pred_check
      _
    $region7: #{tpu_custom_call.1} parent=1 // pred_check_branch
      %27 = sbr.rel (0) target = $region9
    $region8: #{tpu_custom_call.1} parent=1 // pred_region
      %s28 = sadd.s32 0, 0
      %30 = vsyncadd [#allocation7], 0
      %s31 = smul.addr %s28, 2
      %s32 = smul.addr %s31, 8
      %s33 = scalar_lea.hbm %s1, %s32
      %s35 = sshll.u32 %s33, 4
      %s36 = int_to_ptr.hbm [resolvable:$true] %s35
      %s37 = sshll.u32 [#allocation6], 4
      %s38 = int_to_ptr.vmem [resolvable:$true] %s37
      %40 = dma.hbm_to_vmem [thread:$0]  %s36, 256, %s38, [#allocation7]
    $region9: #{tpu_custom_call.1} parent=1 // pred_fallthru
      _
    // Predicated region
    $region10: #{tpu_custom_call.1} parent=1 // pred_check
      _
    $region11: #{tpu_custom_call.1} parent=1 // pred_check_branch
      %42 = sbr.rel (0) target = $region13
    $region12: #{tpu_custom_call.1} parent=1 // pred_region
      %s43 = sadd.s32 0, 0
      %p44 = scmp.lt.s32.totalorder %s43, 0
      %s45 = scalar_select %p44, %s43, 0
      %s46 = smul.addr %s45, 8
      %s47 = scalar_lea.vmem %s2, %s46
      %s48 = sadd.s32 0, 0
    $region13: #{tpu_custom_call.1} parent=1 // pred_fallthru
      _
    // Predicated region
    $region14: #{tpu_custom_call.1} parent=1 // pred_check
      _
    $region15: #{tpu_custom_call.1} parent=1 // pred_check_branch
      %50 = sbr.rel (0) target = $region17
    $region16: #{tpu_custom_call.1} parent=1 // pred_region
      %52 = dma.done [#allocation4], 256
    $region17: #{tpu_custom_call.1} parent=1 // pred_fallthru
      _
    // Predicated region
    $region18: #{tpu_custom_call.1} parent=1 // pred_check
      _
    $region19: #{tpu_custom_call.1} parent=1 // pred_check_branch
      %54 = sbr.rel (0) target = $region21
    $region20: #{tpu_custom_call.1} parent=1 // pred_region
      %56 = dma.done [#allocation7], 256
    $region21: #{tpu_custom_call.1} parent=1 // pred_fallthru
      _
    %s57 = sadd.s32 0, 0
    %p58 = scmp.lt.s32.totalorder %s57, 0
    %s59 = scalar_select %p58, %s57, 0
    %s60 = smul.addr %s59, 8
    %s61 = scalar_lea.vmem %s2, %s60
    %s62 = sadd.s32 0, 0
    %s63 = sadd.s32 0, 0
    %s64 = sadd.s32 0, 0
    %p65 = scmp.lt.s32.totalorder %s64, 0
    %s66 = scalar_select %p65, %s64, 0
    %s67 = smul.addr %s66, 8
    %s68 = scalar_lea.vmem %s2, %s67
    %s69 = sadd.s32 0, 0
    %p70 = scmp.eq.s32.totalorder 0, 0
    // Predicated region
    $region22: #{tpu_custom_call.1} parent=1 // pred_check
      %p71 = pneg %p70
    $region23: #{tpu_custom_call.1} parent=1 // pred_check_branch
      %73 = sbr.rel (%p71) target = $region25
    $region24: #{tpu_custom_call.1} parent=1 // pred_region
      %74 = vst [vmem:[#allocation2] sm:$0xff] 0.0
    $region25: #{tpu_custom_call.1} parent=1 // pred_fallthru
      _
    %v75 = vld [vmem:[#allocation3] sm:$0xff]
    %v76 = vld [vmem:[#allocation6] sm:$0xff]
    %v77 = vsub.f32 %v75, %v76
    %v78 = vmul.f32 %v77, %v77
    %v79 = vld [vmem:[#allocation3 + $0x8] sm:$0xff]
    %v80 = vld [vmem:[#allocation6 + $0x8] sm:$0xff]
    %v81 = vsub.f32 %v79, %v80
    %v82 = vmul.f32 %v81, %v81
    %v83 = vadd.f32 %v78, %v82
    %v84 = vld [vmem:[%s68] sm:$0xff]
    %v85 = vmul.f32 %v84, %v84
    %87 = vset.pattern.permute.xlu0 0
    %88 = vperm.xlu0 %87, %v85
    %v89 = vpop.permute.xlu0 %88
    %v91 = vmul.f32 %v83, %v89
    %v92 = vld [vmem:[#allocation2] sm:$0xff]
    %v93 = vadd.f32 %v92, %v91
    %94 = vst [vmem:[#allocation2] sm:$0xff] %v93
    // Predicated region
    $region26: #{tpu_custom_call.1} parent=1 // pred_check
      %p95 = pneg %p70
    $region27: #{tpu_custom_call.1} parent=1 // pred_check_branch
      %97 = sbr.rel (%p95) target = $region29
    $region28: #{tpu_custom_call.1} parent=1 // pred_region
      %v98 = vld [vmem:[#allocation2] sm:$0xff]
      %99 = vadd.xlane.f32.xlu0 %v98
      %v100 = vpop.xlane.xlu0 %99
      %v101 = vrot.slane %v100, 4
      %v102 = vadd.f32 %v100, %v101
      %v103 = vrot.slane %v102, 2
      %v104 = vadd.f32 %v102, %v103
      %v105 = vrot.slane %v104, 1
      %v106 = vadd.f32 %v104, %v105
      %s107 = vtos %v106
      %s108 = scalar_lea.smem [#allocation8], 0
      %109 = sst [smem:[%s108]] %s107
    $region29: #{tpu_custom_call.1} parent=1 // pred_fallthru
      _
    // Predicated region
    $region30: #{tpu_custom_call.1} parent=1 // pred_check
      _
    $region31: #{tpu_custom_call.1} parent=1 // pred_check_branch
      %111 = sbr.rel (0) target = $region33
    $region32: #{tpu_custom_call.1} parent=1 // pred_region
      %113 = vsyncadd [#allocation5], 0
      %s115 = sshll.u32 %s3, 4
      %s116 = int_to_ptr.hbm [resolvable:$true] %s115
      %118 = dma.smem_to_hbm [#allocation8], 16, %s116, [#allocation5]
    $region33: #{tpu_custom_call.1} parent=1 // pred_fallthru
      _
    // Predicated region
    $region34: #{tpu_custom_call.1} parent=1 // pred_check
      _
    $region35: #{tpu_custom_call.1} parent=1 // pred_check_branch
      %120 = sbr.rel (0) target = $region37
    $region36: #{tpu_custom_call.1} parent=1 // pred_region
      %122 = dma.done [#allocation5], 16
    $region37: #{tpu_custom_call.1} parent=1 // pred_fallthru
      _
    %123 = sfence
    %124 = vsyncpa [#allocation4], 1
    %125 = vsyncpa [#allocation7], 1
    %126 = vsyncpa [#allocation5], 1

</llo_original>
